<compile_context>
chip_gen: v7x
topology: tpu7x:2x2x1
jax: 0.10.0
libtpu: 0.0.40
codegen_flags: <defaults>
</compile_context>

<pallas_src>
import jax
import jax.numpy as jnp
from jax import lax
from jax.experimental import pallas as pl
from jax.experimental.pallas import tpu as pltpu

EPS = 1e-5  # nn.GroupNorm default eps


def _sa_kernel(p_ref, xlo_ref, xhi_ref, o_ref):
    hw = xlo_ref.shape[-1]
    inv_hw = 1.0 / hw

    p = p_ref[...].astype(jnp.float32)            # (cg, 4)
    cw, cb = p[:, 0:1], p[:, 1:2]                 # channel-branch affine
    a, bb = p[:, 2:3], p[:, 3:4]                  # fused GN affine + sweight/sbias

    def channel_att(x):                           # x: (tb, tg, cg, hw) f32
        mean = jnp.sum(x, axis=-1, keepdims=True) * inv_hw
        return x * jax.nn.sigmoid(cw * mean + cb)

    def spatial_att(x):
        s1 = jnp.sum(x, axis=-1, keepdims=True)
        s2 = jnp.sum(x * x, axis=-1, keepdims=True)
        mean = s1 * inv_hw
        var = jnp.maximum(s2 * inv_hw - mean * mean, 0.0)   # biased variance
        inv_std = lax.rsqrt(var + EPS)
        scale = a * inv_std
        shift = bb - scale * mean
        return x * jax.nn.sigmoid(scale * x + shift)

    odt = o_ref.dtype
    xlo = xlo_ref[...].astype(jnp.float32)        # (tb, tg, 2, cg, hw)
    xhi = xhi_ref[...].astype(jnp.float32)

    # chunk 0 -> channel attention, chunk 1 -> spatial attention.
    # Shuffle pair: s=0 (lower-half group) -> first hw lanes, s=1 -> second.
    o_ref[:, :, 0, :, :hw] = channel_att(xlo[:, :, 0]).astype(odt)
    o_ref[:, :, 0, :, hw:] = channel_att(xhi[:, :, 0]).astype(odt)
    o_ref[:, :, 1, :, :hw] = spatial_att(xlo[:, :, 1]).astype(odt)
    o_ref[:, :, 1, :, hw:] = spatial_att(xhi[:, :, 1]).astype(odt)


def _largest_divisor_at_most(n, cap):
    cap = max(1, min(n, int(cap)))
    for d in range(cap, 0, -1):
        if n % d == 0:
            return d
    return 1


def sa_layer_forward(x, params, groups, *, block_budget_bytes=1 << 20):
    b, c, h, w = x.shape
    assert c % (2 * groups) == 0, "channel must be divisible by 2*groups"
    # TODO(synk): odd `groups` needs a per-grid-step branch select; the fused
    # channel_shuffle layout below relies on even `groups` (module default 64).
    assert groups % 2 == 0, "this Pallas path supports even `groups` only"
    cg = c // (2 * groups)
    hw = h * w
    g2 = groups // 2

    # Fold the spatial branch's two affines: sweight*(gn_w*xhat + gn_b) + sbias
    #   = A*xhat + B,  A = sweight*gn_w, B = sweight*gn_b + sbias.
    a = params["sweight"] * params["gn_weight"]
    bb = params["sweight"] * params["gn_bias"] + params["sbias"]
    packed = jnp.stack([params["cweight"], params["cbias"], a, bb],
                       axis=-1).astype(jnp.float32)          # (cg, 4)

    x_view = x.reshape(b, groups, 2, cg, hw)                 # zero-copy view

    # Tile selection: biggest divisors that keep one streamed input block near
    # block_budget_bytes (inputs + output, double-buffered, stays well inside
    # the scoped-VMEM limits on v5e / v6e / v7x).
    itemsize = x.dtype.itemsize
    unit = 2 * cg * hw * itemsize                            # one (b, g) slice
    tile_g = _largest_divisor_at_most(g2, max(1, block_budget_bytes // unit))
    tile_b = _largest_divisor_at_most(
        b, max(1, block_budget_bytes // (unit * tile_g)))
    if (b // tile_b) * (g2 // tile_g) == 1:                  # keep >=2 grid steps
        if b > 1:
            tile_b = _largest_divisor_at_most(b, b // 2)
        elif g2 > 1:
            tile_g = _largest_divisor_at_most(g2, g2 // 2)

    grid = (b // tile_b, g2 // tile_g)
    hi_off = g2 // tile_g                                    # upper-half block offset

    in_blk = (tile_b, tile_g, 2, cg, hw)
    lo_spec = pl.BlockSpec(in_blk, lambda i, j: (i, j, 0, 0, 0))
    hi_spec = pl.BlockSpec(in_blk, lambda i, j: (i, j + hi_off, 0, 0, 0))
    par_spec = pl.BlockSpec((cg, 4), lambda i, j: (0, 0))
    out_spec = pl.BlockSpec((tile_b, tile_g, 2, cg, 2 * hw),
                            lambda i, j: (i, j, 0, 0, 0))

    # Rough double-buffered VMEM footprint (sublane/lane padding included).
    cg_pad = -(-cg // 8) * 8
    hw_pad = -(-hw // 128) * 128
    blk_in = tile_b * tile_g * 2 * cg_pad * hw_pad * itemsize
    vmem_need = 2 * (2 * blk_in + 2 * blk_in) + (2 << 20)
    vmem_limit = int(max(vmem_need, 32 * 1024 * 1024))

    out5 = pl.pallas_call(
        _sa_kernel,
        out_shape=jax.ShapeDtypeStruct((b, g2, 2, cg, 2 * hw), x.dtype),
        grid_spec=pltpu.PrefetchScalarGridSpec(
            num_scalar_prefetch=0,
            grid=grid,
            in_specs=[par_spec, lo_spec, hi_spec],
            out_specs=out_spec),
        compiler_params=pltpu.CompilerParams(
            dimension_semantics=("parallel", "parallel"),
            vmem_limit_bytes=vmem_limit),
    )(packed, x_view, x_view)

    # (b, g2, 2, cg, 2*hw) flattens exactly to the channel_shuffle'd (b, c, h, w).
    return out5.reshape(b, c, h, w)


def sa_layer_ref(x, params, groups):
    """Pure-JAX reference mirroring the PyTorch forward exactly."""
    b, c, h, w = x.shape
    cg = c // (2 * groups)
    xr = x.reshape(b * groups, 2 * cg, h, w)
    x0, x1 = xr[:, :cg], xr[:, cg:]
    rs = lambda p: p.reshape(1, cg, 1, 1)

    xn = jnp.mean(x0, axis=(2, 3), keepdims=True)
    xn = rs(params["cweight"]) * xn + rs(params["cbias"])
    xn = x0 * jax.nn.sigmoid(xn)

    mu = jnp.mean(x1, axis=(2, 3), keepdims=True)
    var = jnp.mean((x1 - mu) ** 2, axis=(2, 3), keepdims=True)
    xs = (x1 - mu) / jnp.sqrt(var + EPS)
    xs = xs * rs(params["gn_weight"]) + rs(params["gn_bias"])
    xs = rs(params["sweight"]) * xs + rs(params["sbias"])
    xs = x1 * jax.nn.sigmoid(xs)

    out = jnp.concatenate([xn, xs], axis=1).reshape(b, c, h, w)
    out = out.reshape(b, 2, c // 2, h, w).transpose(0, 2, 1, 3, 4).reshape(b, c, h, w)
    return out


if __name__ == "__main__":
    b, c, h, w = 2, 32, 16, 16
    groups = 4
    cg = c // (2 * groups)   # 4

    key = jax.random.PRNGKey(0)
    kx, k1, k2, k3, k4, k5, k6 = jax.random.split(key, 7)
    x = jax.random.normal(kx, (b, c, h, w), dtype=jnp.float32)

    # deterministic synthetic parameters (shapes per __init__; randomized so the
    # compute path is non-trivial instead of the zeros/ones defaults)
    params = {
        "cweight":   0.5 * jax.random.normal(k1, (cg,), jnp.float32),
        "cbias":     1.0 + 0.1 * jax.random.normal(k2, (cg,), jnp.float32),
        "sweight":   0.5 * jax.random.normal(k3, (cg,), jnp.float32),
        "sbias":     1.0 + 0.1 * jax.random.normal(k4, (cg,), jnp.float32),
        "gn_weight": 1.0 + 0.1 * jax.random.normal(k5, (cg,), jnp.float32),
        "gn_bias":   0.1 * jax.random.normal(k6, (cg,), jnp.float32),
    }

    fwd = jax.jit(lambda xx, pp: sa_layer_forward(xx, pp, groups))
    out = jax.block_until_ready(fwd(x, params))
    ref = jax.block_until_ready(sa_layer_ref(x, params, groups))

    assert out.shape == (b, c, h, w)
    err = jnp.max(jnp.abs(out - ref))
    assert jnp.allclose(out, ref, atol=3e-5, rtol=3e-5), f"max err {err}"
    print("KERNEL_OK")
</pallas_src>

<mosaic_0001>
module attributes {stable_mosaic.version = 11 : i64} {
  func.func @_sa_kernel(%arg0: i32, %arg1: i32, %arg2: memref<4x4xf32, #tpu.memory_space<vmem>>, %arg3: memref<1x2x2x4x256xf32, #tpu.memory_space<vmem>>, %arg4: memref<1x2x2x4x256xf32, #tpu.memory_space<vmem>>, %arg5: memref<1x2x2x4x512xf32, #tpu.memory_space<vmem>>) attributes {dimension_semantics = [#tpu.dimension_semantics<parallel>, #tpu.dimension_semantics<parallel>], iteration_bounds = array<i64: 2, 1>, scalar_prefetch = 0 : i64, scratch_operands = 0 : i64, tpu.core_type = #tpu.core_type<tc>, window_params = [{pipeline_mode = #tpu.pipeline_mode<synchronous>, transform_indices = @transform_0, window_bounds = array<i64: 4, 4>}, {transform_indices = @transform_1, window_bounds = array<i64: 1, 2, 2, 4, 256>}, {transform_indices = @transform_2, window_bounds = array<i64: 1, 2, 2, 4, 256>}, {transform_indices = @transform_3, window_bounds = array<i64: 1, 2, 2, 4, 512>}]} {
    %c0 = arith.constant 0 : index
    %c0_0 = arith.constant 0 : index
    %0 = vector.load %arg2[%c0, %c0_0] : memref<4x4xf32, #tpu.memory_space<vmem>>, vector<4x4xf32>
    %1 = vector.extract_strided_slice %0 {offsets = [0, 0], sizes = [4, 1], strides = [1, 1]} : vector<4x4xf32> to vector<4x1xf32>
    %2 = vector.extract_strided_slice %0 {offsets = [0, 1], sizes = [4, 1], strides = [1, 1]} : vector<4x4xf32> to vector<4x1xf32>
    %3 = vector.extract_strided_slice %0 {offsets = [0, 2], sizes = [4, 1], strides = [1, 1]} : vector<4x4xf32> to vector<4x1xf32>
    %4 = vector.extract_strided_slice %0 {offsets = [0, 3], sizes = [4, 1], strides = [1, 1]} : vector<4x4xf32> to vector<4x1xf32>
    %c0_1 = arith.constant 0 : index
    %c0_2 = arith.constant 0 : index
    %c0_3 = arith.constant 0 : index
    %c0_4 = arith.constant 0 : index
    %c0_5 = arith.constant 0 : index
    %5 = vector.load %arg3[%c0_1, %c0_2, %c0_3, %c0_4, %c0_5] : memref<1x2x2x4x256xf32, #tpu.memory_space<vmem>>, vector<1x2x2x4x256xf32>
    %c0_6 = arith.constant 0 : index
    %c0_7 = arith.constant 0 : index
    %c0_8 = arith.constant 0 : index
    %c0_9 = arith.constant 0 : index
    %c0_10 = arith.constant 0 : index
    %6 = vector.load %arg4[%c0_6, %c0_7, %c0_8, %c0_9, %c0_10] : memref<1x2x2x4x256xf32, #tpu.memory_space<vmem>>, vector<1x2x2x4x256xf32>
    %7 = vector.extract_strided_slice %5 {offsets = [0, 0, 0, 0, 0], sizes = [1, 2, 1, 4, 256], strides = [1, 1, 1, 1, 1]} : vector<1x2x2x4x256xf32> to vector<1x2x1x4x256xf32>
    %8 = vector.shape_cast %7 : vector<1x2x1x4x256xf32> to vector<1x2x4x256xf32>
    %cst = arith.constant dense<0.000000e+00> : vector<1x2x4xf32>
    %9 = vector.multi_reduction <add>, %8, %cst [3] : vector<1x2x4x256xf32> to vector<1x2x4xf32>
    %10 = vector.shape_cast %9 : vector<1x2x4xf32> to vector<1x2x4x1xf32>
    %cst_11 = arith.constant 3.906250e-03 : f32
    %11 = vector.broadcast %cst_11 : f32 to vector<1x2x4x1xf32>
    %12 = arith.mulf %10, %11 : vector<1x2x4x1xf32>
    %13 = vector.shape_cast %1 : vector<4x1xf32> to vector<1x1x4x1xf32>
    %14 = vector.broadcast %13 : vector<1x1x4x1xf32> to vector<1x2x4x1xf32>
    %15 = arith.mulf %14, %12 : vector<1x2x4x1xf32>
    %16 = vector.shape_cast %2 : vector<4x1xf32> to vector<1x1x4x1xf32>
    %17 = vector.broadcast %16 : vector<1x1x4x1xf32> to vector<1x2x4x1xf32>
    %18 = arith.addf %15, %17 : vector<1x2x4x1xf32>
    %19 = arith.negf %18 : vector<1x2x4x1xf32>
    %20 = math.exp %19 : vector<1x2x4x1xf32>
    %cst_12 = arith.constant 1.000000e+00 : f32
    %21 = vector.broadcast %cst_12 : f32 to vector<1x2x4x1xf32>
    %22 = arith.addf %21, %20 : vector<1x2x4x1xf32>
    %23 = arith.divf %21, %22 : vector<1x2x4x1xf32>
    %24 = vector.broadcast %23 : vector<1x2x4x1xf32> to vector<1x2x4x256xf32>
    %25 = arith.mulf %8, %24 : vector<1x2x4x256xf32>
    %c0_13 = arith.constant 0 : index
    %c0_14 = arith.constant 0 : index
    %c0_15 = arith.constant 0 : index
    %c0_16 = arith.constant 0 : index
    %c0_17 = arith.constant 0 : index
    %26 = vector.load %arg5[%c0_13, %c0_14, %c0_15, %c0_16, %c0_17] : memref<1x2x2x4x512xf32, #tpu.memory_space<vmem>>, vector<1x2x1x4x256xf32>
    %27 = vector.shape_cast %26 : vector<1x2x1x4x256xf32> to vector<1x2x4x256xf32>
    %28 = vector.shape_cast %25 : vector<1x2x4x256xf32> to vector<1x2x1x4x256xf32>
    tpu.vector_store %arg5[%c0_13, %c0_14, %c0_15, %c0_16, %c0_17], %28 {strides = array<i32>} : memref<1x2x2x4x512xf32, #tpu.memory_space<vmem>>, vector<1x2x1x4x256xf32>,
    %29 = vector.extract_strided_slice %6 {offsets = [0, 0, 0, 0, 0], sizes = [1, 2, 1, 4, 256], strides = [1, 1, 1, 1, 1]} : vector<1x2x2x4x256xf32> to vector<1x2x1x4x256xf32>
    %30 = vector.shape_cast %29 : vector<1x2x1x4x256xf32> to vector<1x2x4x256xf32>
    %cst_18 = arith.constant dense<0.000000e+00> : vector<1x2x4xf32>
    %31 = vector.multi_reduction <add>, %30, %cst_18 [3] : vector<1x2x4x256xf32> to vector<1x2x4xf32>
    %32 = vector.shape_cast %31 : vector<1x2x4xf32> to vector<1x2x4x1xf32>
    %cst_19 = arith.constant 3.906250e-03 : f32
    %33 = vector.broadcast %cst_19 : f32 to vector<1x2x4x1xf32>
    %34 = arith.mulf %32, %33 : vector<1x2x4x1xf32>
    %35 = vector.shape_cast %1 : vector<4x1xf32> to vector<1x1x4x1xf32>
    %36 = vector.broadcast %35 : vector<1x1x4x1xf32> to vector<1x2x4x1xf32>
    %37 = arith.mulf %36, %34 : vector<1x2x4x1xf32>
    %38 = vector.shape_cast %2 : vector<4x1xf32> to vector<1x1x4x1xf32>
    %39 = vector.broadcast %38 : vector<1x1x4x1xf32> to vector<1x2x4x1xf32>
    %40 = arith.addf %37, %39 : vector<1x2x4x1xf32>
    %41 = arith.negf %40 : vector<1x2x4x1xf32>
    %42 = math.exp %41 : vector<1x2x4x1xf32>
    %cst_20 = arith.constant 1.000000e+00 : f32
    %43 = vector.broadcast %cst_20 : f32 to vector<1x2x4x1xf32>
    %44 = arith.addf %43, %42 : vector<1x2x4x1xf32>
    %45 = arith.divf %43, %44 : vector<1x2x4x1xf32>
    %46 = vector.broadcast %45 : vector<1x2x4x1xf32> to vector<1x2x4x256xf32>
    %47 = arith.mulf %30, %46 : vector<1x2x4x256xf32>
    %c0_21 = arith.constant 0 : index
    %c0_22 = arith.constant 0 : index
    %c0_23 = arith.constant 0 : index
    %c0_24 = arith.constant 0 : index
    %c256 = arith.constant 256 : index
    %48 = vector.load %arg5[%c0_21, %c0_22, %c0_23, %c0_24, %c256] : memref<1x2x2x4x512xf32, #tpu.memory_space<vmem>>, vector<1x2x1x4x256xf32>
    %49 = vector.shape_cast %48 : vector<1x2x1x4x256xf32> to vector<1x2x4x256xf32>
    %50 = vector.shape_cast %47 : vector<1x2x4x256xf32> to vector<1x2x1x4x256xf32>
    tpu.vector_store %arg5[%c0_21, %c0_22, %c0_23, %c0_24, %c256], %50 {strides = array<i32>} : memref<1x2x2x4x512xf32, #tpu.memory_space<vmem>>, vector<1x2x1x4x256xf32>,
    %51 = vector.extract_strided_slice %5 {offsets = [0, 0, 1, 0, 0], sizes = [1, 2, 1, 4, 256], strides = [1, 1, 1, 1, 1]} : vector<1x2x2x4x256xf32> to vector<1x2x1x4x256xf32>
    %52 = vector.shape_cast %51 : vector<1x2x1x4x256xf32> to vector<1x2x4x256xf32>
    %cst_25 = arith.constant dense<0.000000e+00> : vector<1x2x4xf32>
    %53 = vector.multi_reduction <add>, %52, %cst_25 [3] : vector<1x2x4x256xf32> to vector<1x2x4xf32>
    %54 = vector.shape_cast %53 : vector<1x2x4xf32> to vector<1x2x4x1xf32>
    %55 = arith.mulf %52, %52 : vector<1x2x4x256xf32>
    %cst_26 = arith.constant dense<0.000000e+00> : vector<1x2x4xf32>
    %56 = vector.multi_reduction <add>, %55, %cst_26 [3] : vector<1x2x4x256xf32> to vector<1x2x4xf32>
    %57 = vector.shape_cast %56 : vector<1x2x4xf32> to vector<1x2x4x1xf32>
    %cst_27 = arith.constant 3.906250e-03 : f32
    %58 = vector.broadcast %cst_27 : f32 to vector<1x2x4x1xf32>
    %59 = arith.mulf %54, %58 : vector<1x2x4x1xf32>
    %cst_28 = arith.constant 3.906250e-03 : f32
    %60 = vector.broadcast %cst_28 : f32 to vector<1x2x4x1xf32>
    %61 = arith.mulf %57, %60 : vector<1x2x4x1xf32>
    %62 = arith.mulf %59, %59 : vector<1x2x4x1xf32>
    %63 = arith.subf %61, %62 : vector<1x2x4x1xf32>
    %cst_29 = arith.constant 0.000000e+00 : f32
    %64 = vector.broadcast %cst_29 : f32 to vector<1x2x4x1xf32>
    %65 = arith.maximumf %63, %64 : vector<1x2x4x1xf32>
    %cst_30 = arith.constant 9.99999974E-6 : f32
    %66 = vector.broadcast %cst_30 : f32 to vector<1x2x4x1xf32>
    %67 = arith.addf %65, %66 : vector<1x2x4x1xf32>
    %68 = math.rsqrt %67 : vector<1x2x4x1xf32>
    %69 = vector.shape_cast %3 : vector<4x1xf32> to vector<1x1x4x1xf32>
    %70 = vector.broadcast %69 : vector<1x1x4x1xf32> to vector<1x2x4x1xf32>
    %71 = arith.mulf %70, %68 : vector<1x2x4x1xf32>
    %72 = arith.mulf %71, %59 : vector<1x2x4x1xf32>
    %73 = vector.shape_cast %4 : vector<4x1xf32> to vector<1x1x4x1xf32>
    %74 = vector.broadcast %73 : vector<1x1x4x1xf32> to vector<1x2x4x1xf32>
    %75 = arith.subf %74, %72 : vector<1x2x4x1xf32>
    %76 = vector.broadcast %71 : vector<1x2x4x1xf32> to vector<1x2x4x256xf32>
    %77 = arith.mulf %76, %52 : vector<1x2x4x256xf32>
    %78 = vector.broadcast %75 : vector<1x2x4x1xf32> to vector<1x2x4x256xf32>
    %79 = arith.addf %77, %78 : vector<1x2x4x256xf32>
    %80 = arith.negf %79 : vector<1x2x4x256xf32>
    %81 = math.exp %80 : vector<1x2x4x256xf32>
    %cst_31 = arith.constant 1.000000e+00 : f32
    %82 = vector.broadcast %cst_31 : f32 to vector<1x2x4x256xf32>
    %83 = arith.addf %82, %81 : vector<1x2x4x256xf32>
    %84 = arith.divf %82, %83 : vector<1x2x4x256xf32>
    %85 = arith.mulf %52, %84 : vector<1x2x4x256xf32>
    %c0_32 = arith.constant 0 : index
    %c0_33 = arith.constant 0 : index
    %c1 = arith.constant 1 : index
    %c0_34 = arith.constant 0 : index
    %c0_35 = arith.constant 0 : index
    %86 = vector.load %arg5[%c0_32, %c0_33, %c1, %c0_34, %c0_35] : memref<1x2x2x4x512xf32, #tpu.memory_space<vmem>>, vector<1x2x1x4x256xf32>
    %87 = vector.shape_cast %86 : vector<1x2x1x4x256xf32> to vector<1x2x4x256xf32>
    %88 = vector.shape_cast %85 : vector<1x2x4x256xf32> to vector<1x2x1x4x256xf32>
    tpu.vector_store %arg5[%c0_32, %c0_33, %c1, %c0_34, %c0_35], %88 {strides = array<i32>} : memref<1x2x2x4x512xf32, #tpu.memory_space<vmem>>, vector<1x2x1x4x256xf32>,
    %89 = vector.extract_strided_slice %6 {offsets = [0, 0, 1, 0, 0], sizes = [1, 2, 1, 4, 256], strides = [1, 1, 1, 1, 1]} : vector<1x2x2x4x256xf32> to vector<1x2x1x4x256xf32>
    %90 = vector.shape_cast %89 : vector<1x2x1x4x256xf32> to vector<1x2x4x256xf32>
    %cst_36 = arith.constant dense<0.000000e+00> : vector<1x2x4xf32>
    %91 = vector.multi_reduction <add>, %90, %cst_36 [3] : vector<1x2x4x256xf32> to vector<1x2x4xf32>
    %92 = vector.shape_cast %91 : vector<1x2x4xf32> to vector<1x2x4x1xf32>
    %93 = arith.mulf %90, %90 : vector<1x2x4x256xf32>
    %cst_37 = arith.constant dense<0.000000e+00> : vector<1x2x4xf32>
    %94 = vector.multi_reduction <add>, %93, %cst_37 [3] : vector<1x2x4x256xf32> to vector<1x2x4xf32>
    %95 = vector.shape_cast %94 : vector<1x2x4xf32> to vector<1x2x4x1xf32>
    %cst_38 = arith.constant 3.906250e-03 : f32
    %96 = vector.broadcast %cst_38 : f32 to vector<1x2x4x1xf32>
    %97 = arith.mulf %92, %96 : vector<1x2x4x1xf32>
    %cst_39 = arith.constant 3.906250e-03 : f32
    %98 = vector.broadcast %cst_39 : f32 to vector<1x2x4x1xf32>
    %99 = arith.mulf %95, %98 : vector<1x2x4x1xf32>
    %100 = arith.mulf %97, %97 : vector<1x2x4x1xf32>
    %101 = arith.subf %99, %100 : vector<1x2x4x1xf32>
    %cst_40 = arith.constant 0.000000e+00 : f32
    %102 = vector.broadcast %cst_40 : f32 to vector<1x2x4x1xf32>
    %103 = arith.maximumf %101, %102 : vector<1x2x4x1xf32>
    %cst_41 = arith.constant 9.99999974E-6 : f32
    %104 = vector.broadcast %cst_41 : f32 to vector<1x2x4x1xf32>
    %105 = arith.addf %103, %104 : vector<1x2x4x1xf32>
    %106 = math.rsqrt %105 : vector<1x2x4x1xf32>
    %107 = vector.shape_cast %3 : vector<4x1xf32> to vector<1x1x4x1xf32>
    %108 = vector.broadcast %107 : vector<1x1x4x1xf32> to vector<1x2x4x1xf32>
    %109 = arith.mulf %108, %106 : vector<1x2x4x1xf32>
    %110 = arith.mulf %109, %97 : vector<1x2x4x1xf32>
    %111 = vector.shape_cast %4 : vector<4x1xf32> to vector<1x1x4x1xf32>
    %112 = vector.broadcast %111 : vector<1x1x4x1xf32> to vector<1x2x4x1xf32>
    %113 = arith.subf %112, %110 : vector<1x2x4x1xf32>
    %114 = vector.broadcast %109 : vector<1x2x4x1xf32> to vector<1x2x4x256xf32>
    %115 = arith.mulf %114, %90 : vector<1x2x4x256xf32>
    %116 = vector.broadcast %113 : vector<1x2x4x1xf32> to vector<1x2x4x256xf32>
    %117 = arith.addf %115, %116 : vector<1x2x4x256xf32>
    %118 = arith.negf %117 : vector<1x2x4x256xf32>
    %119 = math.exp %118 : vector<1x2x4x256xf32>
    %cst_42 = arith.constant 1.000000e+00 : f32
    %120 = vector.broadcast %cst_42 : f32 to vector<1x2x4x256xf32>
    %121 = arith.addf %120, %119 : vector<1x2x4x256xf32>
    %122 = arith.divf %120, %121 : vector<1x2x4x256xf32>
    %123 = arith.mulf %90, %122 : vector<1x2x4x256xf32>
    %c0_43 = arith.constant 0 : index
    %c0_44 = arith.constant 0 : index
    %c1_45 = arith.constant 1 : index
    %c0_46 = arith.constant 0 : index
    %c256_47 = arith.constant 256 : index
    %124 = vector.load %arg5[%c0_43, %c0_44, %c1_45, %c0_46, %c256_47] : memref<1x2x2x4x512xf32, #tpu.memory_space<vmem>>, vector<1x2x1x4x256xf32>
    %125 = vector.shape_cast %124 : vector<1x2x1x4x256xf32> to vector<1x2x4x256xf32>
    %126 = vector.shape_cast %123 : vector<1x2x4x256xf32> to vector<1x2x1x4x256xf32>
    tpu.vector_store %arg5[%c0_43, %c0_44, %c1_45, %c0_46, %c256_47], %126 {strides = array<i32>} : memref<1x2x2x4x512xf32, #tpu.memory_space<vmem>>, vector<1x2x1x4x256xf32>,
    return
  }
  func.func @transform_0(%arg0: i32, %arg1: i32) -> (i32, i32) {
    %c0_i32 = arith.constant 0 : i32
    %c0_i32_0 = arith.constant 0 : i32
    %c0_i32_1 = arith.constant 0 : i32
    return %c0_i32, %c0_i32_0 : i32, i32
  }
  func.func @transform_1(%arg0: i32, %arg1: i32) -> (i32, i32, i32, i32, i32) {
    %c0_i32 = arith.constant 0 : i32
    %c0_i32_0 = arith.constant 0 : i32
    %c0_i32_1 = arith.constant 0 : i32
    %c0_i32_2 = arith.constant 0 : i32
    return %arg0, %arg1, %c0_i32, %c0_i32_0, %c0_i32_1 : i32, i32, i32, i32, i32
  }
  func.func @transform_2(%arg0: i32, %arg1: i32) -> (i32, i32, i32, i32, i32) {
    %c1_i32 = arith.constant 1 : i32
    %0 = arith.addi %arg1, %c1_i32 : i32
    %c0_i32 = arith.constant 0 : i32
    %c0_i32_0 = arith.constant 0 : i32
    %c0_i32_1 = arith.constant 0 : i32
    %c0_i32_2 = arith.constant 0 : i32
    return %arg0, %0, %c0_i32, %c0_i32_0, %c0_i32_1 : i32, i32, i32, i32, i32
  }
  func.func @transform_3(%arg0: i32, %arg1: i32) -> (i32, i32, i32, i32, i32) {
    %c0_i32 = arith.constant 0 : i32
    %c0_i32_0 = arith.constant 0 : i32
    %c0_i32_1 = arith.constant 0 : i32
    %c0_i32_2 = arith.constant 0 : i32
    return %arg0, %arg1, %c0_i32, %c0_i32_0, %c0_i32_1 : i32, i32, i32, i32, i32
  }
}

</mosaic_0001>

<llo_original>
// kernel: _lambda_.1
$region0: #{_lambda_.1}
  #allocation0 [shape = 'u32[]', space=smem, size = 0x4, offset = 0x4, fixed_abs, tag = 'smem constant byte address 0x4 - core index']
  #allocation1 [shape = 'u32[144,128]{1,0:T(1,128)}', space=vmem, size = 0x12000, scoped, tag = 'internal scratch']
  %s0 = inlined_call_operand.vmem [shape: f32[4,4], index: 0, kind: input, shape index: {}]
  %s1 = inlined_call_operand.vmem [shape: f32[2,4,2,4,256], index: 1, kind: input, shape index: {}, may-alias: {1,2}]
  %s2 = inlined_call_operand.vmem [shape: f32[2,4,2,4,256], index: 2, kind: input, shape index: {}, may-alias: {1,2}]
  %s3 = inlined_call_operand.vmem [shape: f32[2,2,2,4,512], index: 3, kind: output, shape index: {}]
  %s4 = sld [smem:[#allocation0]]
  $region45: #{_lambda_.1} parent=0
    _
  %s6 = ssub.s32 1, %s4
  %s7 = scalar_select 0, %s6, %s4
  loop: start=0, step=1, limit=4
  $region2: #{_lambda_.1} parent=0 // loop_pre_header
    _
  $region3: #{_lambda_.1} parent=0 // loop_header
    %s9 = sphi 0, %s13
    %p10 = scmp.ge.s32.totalorder %s9, 4
    %s16 = sphi 0, %s28
    %s17 = sphi 0, %s24
    %s18 = sphi 0, %s16
    %s19 = sphi 0, %s17
    %s20 = sphi 0, %s18
    %s21 = sphi 0, %s19
    %s29 = sphi 0, %s29
    %s31 = sphi 0, %s29
    %s32 = sphi 0, %s31
    %s46 = sphi 0, %s32
    %s54 = sphi 0, %s56
    %s57 = sphi 0, %s54
    %s58 = sphi 0, %s57
    %s74 = sphi 0, %s58
    %s84 = sphi 0, %s86
    %s87 = sphi 0, %s84
    %s88 = sphi 0, %s87
    %s104 = sphi 0, %s88
    %s112 = sphi 0, %s114
    %s115 = sphi 0, %s112
    %s116 = sphi 0, %s115
    %s132 = sphi 0, %s116
  $region4: #{_lambda_.1} parent=0 // loop_header_branch
    %12 = sbr.rel (%p10) target = $region8
  $region5: #{_lambda_.1} parent=0 // loop_body
    %s14 = ssub.s32 %s9, 1
    %s15 = ssub.s32 %s9, 2
    %s22 = sadd.s32 1, %s17
    %p23 = scmp.ge.s32.totalorder %s22, 1
    %s24 = scalar_select %p23, 0, %s22
    %s25 = sadd.s32 1, %s16
    %s26 = scalar_select %p23, %s25, %s16
    %p27 = scmp.ge.s32.totalorder %s26, 2
    %s28 = scalar_select %p27, 0, %s26
    %s30 = sadd.s32 %s29, 1
    %p33 = scmp.eq.s32.totalorder %s9, 1
    %p34 = scmp.ne.s32.totalorder %s29, %s31
    %p35 = scmp.eq.s32.totalorder %s9, 0
    %p36 = por %p34, %p35
    %p37 = scmp.ne.s32.totalorder %s29, %s31
    %p38 = scmp.eq.s32.totalorder %s14, 1
    %p39 = por %p37, %p38
    %p40 = scmp.ne.s32.totalorder %s31, %s32
    %p41 = scmp.eq.s32.totalorder %s14, 0
    %p42 = por %p40, %p41
    %p43 = scmp.ne.s32.totalorder %s31, %s32
    %p44 = scmp.eq.s32.totalorder %s15, 1
    %p45 = por %p43, %p44
    %p47 = scmp.ne.s32.totalorder %s32, %s46
    %p48 = scmp.eq.s32.totalorder %s15, 0
    %p49 = por %p47, %p48
    %s50 = ssub.s32 %s16, %s28
    %s51 = ssub.s32 %s17, %s24
    %s52 = sor.u32 %s50, %s51
    %p53 = scmp.eq.s32.totalorder %s52, 0
    %s55 = sadd.s32 %s54, 1
    %s56 = scalar_select %p53, %s54, %s55
    %p59 = pneg %p53
    %p60 = scmp.eq.s32.totalorder %s9, 1
    %p61 = por %p59, %p60
    %p62 = scmp.ne.s32.totalorder %s54, %s57
    %p63 = scmp.eq.s32.totalorder %s9, 0
    %p64 = por %p62, %p63
    %p65 = scmp.ne.s32.totalorder %s54, %s57
    %p66 = scmp.eq.s32.totalorder %s14, 1
    %p67 = por %p65, %p66
    %p68 = scmp.ne.s32.totalorder %s57, %s58
    %p69 = scmp.eq.s32.totalorder %s14, 0
    %p70 = por %p68, %p69
    %p71 = scmp.ne.s32.totalorder %s57, %s58
    %p72 = scmp.eq.s32.totalorder %s15, 1
    %p73 = por %p71, %p72
    %p75 = scmp.ne.s32.totalorder %s58, %s74
    %p76 = scmp.eq.s32.totalorder %s15, 0
    %p77 = por %p75, %p76
    %s78 = sadd.s32 %s17, 1
    %s79 = sadd.s32 %s24, 1
    %s80 = ssub.s32 %s16, %s28
    %s81 = ssub.s32 %s78, %s79
    %s82 = sor.u32 %s80, %s81
    %p83 = scmp.eq.s32.totalorder %s82, 0
    %s85 = sadd.s32 %s84, 1
    %s86 = scalar_select %p83, %s84, %s85
    %p89 = pneg %p83
    %p90 = scmp.eq.s32.totalorder %s9, 1
    %p91 = por %p89, %p90
    %p92 = scmp.ne.s32.totalorder %s84, %s87
    %p93 = scmp.eq.s32.totalorder %s9, 0
    %p94 = por %p92, %p93
    %p95 = scmp.ne.s32.totalorder %s84, %s87
    %p96 = scmp.eq.s32.totalorder %s14, 1
    %p97 = por %p95, %p96
    %p98 = scmp.ne.s32.totalorder %s87, %s88
    %p99 = scmp.eq.s32.totalorder %s14, 0
    %p100 = por %p98, %p99
    %p101 = scmp.ne.s32.totalorder %s87, %s88
    %p102 = scmp.eq.s32.totalorder %s15, 1
    %p103 = por %p101, %p102
    %p105 = scmp.ne.s32.totalorder %s88, %s104
    %p106 = scmp.eq.s32.totalorder %s15, 0
    %p107 = por %p105, %p106
    %s108 = ssub.s32 %s16, %s28
    %s109 = ssub.s32 %s17, %s24
    %s110 = sor.u32 %s108, %s109
    %p111 = scmp.eq.s32.totalorder %s110, 0
    %s113 = sadd.s32 %s112, 1
    %s114 = scalar_select %p111, %s112, %s113
    %p117 = pneg %p111
    %p118 = scmp.eq.s32.totalorder %s9, 1
    %p119 = por %p117, %p118
    %p120 = scmp.ne.s32.totalorder %s112, %s115
    %p121 = scmp.eq.s32.totalorder %s9, 0
    %p122 = por %p120, %p121
    %p123 = scmp.ne.s32.totalorder %s112, %s115
    %p124 = scmp.eq.s32.totalorder %s14, 1
    %p125 = por %p123, %p124
    %p126 = scmp.ne.s32.totalorder %s115, %s116
    %p127 = scmp.eq.s32.totalorder %s14, 0
    %p128 = por %p126, %p127
    %p129 = scmp.ne.s32.totalorder %s115, %s116
    %p130 = scmp.eq.s32.totalorder %s15, 1
    %p131 = por %p129, %p130
    %p133 = scmp.ne.s32.totalorder %s116, %s132
    %p134 = scmp.eq.s32.totalorder %s15, 0
    %p135 = por %p133, %p134
    %p136 = scmp.le.s32.totalorder 1, %s9
    %p137 = scmp.lt.s32.totalorder %s9, 3
    %p138 = pnand %p136, %p137
    %p139 = pneg %p138
    // Predicated region
    $region9: #{_lambda_.1} parent=5 // pred_check
      _
    $region10: #{_lambda_.1} parent=5 // pred_check_branch
      %141 = sbr.rel (%p138) target = $region12
    $region11: #{_lambda_.1} parent=5 // pred_region
      %s142 = ssub.s32 %s9, 1
      // Predicated region
      $region13: #{_lambda_.1} parent=11 // pred_check
        %p143 = pneg %p42
      $region14: #{_lambda_.1} parent=11 // pred_check_branch
        %145 = sbr.rel (%p143) target = $region16
      $region15: #{_lambda_.1} parent=11 // pred_region
        _
      $region16: #{_lambda_.1} parent=11 // pred_fallthru
        _
    $region12: #{_lambda_.1} parent=5 // pred_fallthru
      _
    %p146 = scmp.lt.s32.totalorder %s9, 2
    // Predicated region
    $region17: #{_lambda_.1} parent=5 // pred_check
      %p147 = pneg %p146
    $region18: #{_lambda_.1} parent=5 // pred_check_branch
      %149 = sbr.rel (%p147) target = $region20
    $region19: #{_lambda_.1} parent=5 // pred_region
      // Predicated region
      $region21: #{_lambda_.1} parent=19 // pred_check
        %p150 = pneg %p64
      $region22: #{_lambda_.1} parent=19 // pred_check_branch
        %152 = sbr.rel (%p150) target = $region24
      $region23: #{_lambda_.1} parent=19 // pred_region
        %s153 = smul.u32 2, %s17
        %p154 = scmp.lt.s32.totalorder %s16, 1
        %s155 = scalar_select %p154, %s16, 1
        %p156 = scmp.lt.s32.totalorder %s153, 3
        %s157 = scalar_select %p156, %s153, 3
        %s158 = smul.addr %s157, 4
        %s159 = smul.addr %s155, 16
        %s160 = sadd.s32 %s158, %s159
        %s161 = smul.addr %s160, 4
        %s162 = scalar_lea.vmem %s1, %s161
        %s163 = smul.u32 2, %s17
      $region24: #{_lambda_.1} parent=19 // pred_fallthru
        _
      // Predicated region
      $region25: #{_lambda_.1} parent=19 // pred_check
        %p164 = pneg %p94
      $region26: #{_lambda_.1} parent=19 // pred_check_branch
        %166 = sbr.rel (%p164) target = $region28
      $region27: #{_lambda_.1} parent=19 // pred_region
        %s167 = sadd.s32 %s17, 1
        %s168 = smul.u32 2, %s167
        %p169 = scmp.lt.s32.totalorder %s16, 1
        %s170 = scalar_select %p169, %s16, 1
        %p171 = scmp.lt.s32.totalorder %s168, 3
        %s172 = scalar_select %p171, %s168, 3
        %s173 = smul.addr %s172, 4
        %s174 = smul.addr %s170, 16
        %s175 = sadd.s32 %s173, %s174
        %s176 = smul.addr %s175, 4
        %s177 = scalar_lea.vmem %s2, %s176
        %s178 = sadd.s32 %s17, 1
        %s179 = smul.u32 2, %s178
      $region28: #{_lambda_.1} parent=19 // pred_fallthru
        _
    $region20: #{_lambda_.1} parent=5 // pred_fallthru
      _
    %p180 = scmp.le.s32.totalorder 1, %s9
    %p181 = scmp.lt.s32.totalorder %s9, 3
    %p182 = pnand %p180, %p181
    %p183 = pneg %p182
    // Predicated region
    $region29: #{_lambda_.1} parent=5 // pred_check
      _
    $region30: #{_lambda_.1} parent=5 // pred_check_branch
      %185 = sbr.rel (%p182) target = $region32
    $region31: #{_lambda_.1} parent=5 // pred_region
      %s186 = ssub.s32 %s9, 1
      %p187 = pneg %p42
      %p188 = pneg %p39
      %s189 = smul.u32 2, %s19
      %p190 = scmp.lt.s32.totalorder %s18, 1
      %s191 = scalar_select %p190, %s18, 1
      %p192 = scmp.lt.s32.totalorder %s189, 3
      %s193 = scalar_select %p192, %s189, 3
      %s194 = smul.addr %s193, 4
      %s195 = smul.addr %s191, 16
      %s196 = sadd.s32 %s194, %s195
      %s197 = smul.addr %s196, 4
      %s198 = scalar_lea.vmem %s1, %s197
      %p199 = pneg %p70
      %p200 = pneg %p67
      %s201 = sadd.s32 %s19, 1
      %s202 = smul.u32 2, %s201
      %p203 = scmp.lt.s32.totalorder %s18, 1
      %s204 = scalar_select %p203, %s18, 1
      %p205 = scmp.lt.s32.totalorder %s202, 3
      %s206 = scalar_select %p205, %s202, 3
      %s207 = smul.addr %s206, 4
      %s208 = smul.addr %s204, 16
      %s209 = sadd.s32 %s207, %s208
      %s210 = smul.addr %s209, 4
      %s211 = scalar_lea.vmem %s2, %s210
      %p212 = pneg %p100
      %p213 = pneg %p97
      %p214 = pneg %p128
      %p215 = pneg %p125
      %s216 = smul.u32 2, %s19
      %p217 = scmp.lt.s32.totalorder %s18, 1
      %s218 = scalar_select %p217, %s18, 1
      %p219 = scmp.lt.s32.totalorder %s216, 1
      %s220 = scalar_select %p219, %s216, 1
      %s221 = smul.addr %s220, 8
      %s222 = smul.addr %s218, 16
      %s223 = sadd.s32 %s221, %s222
      %s224 = smul.addr %s223, 4
      %s225 = scalar_lea.vmem %s3, %s224
      %s226 = smul.u32 2, %s19
      %p227 = scmp.lt.s32.totalorder %s18, 1
      %s228 = scalar_select %p227, %s18, 1
      %p229 = scmp.lt.s32.totalorder %s226, 3
      %s230 = scalar_select %p229, %s226, 3
      %s231 = smul.addr %s230, 4
      %s232 = smul.addr %s228, 16
      %s233 = sadd.s32 %s231, %s232
      %s234 = smul.addr %s233, 4
      %s235 = scalar_lea.vmem %s1, %s234
      %s236 = smul.u32 2, %s19
      %s237 = sadd.s32 %s19, 1
      %s238 = smul.u32 2, %s237
      %p239 = scmp.lt.s32.totalorder %s18, 1
      %s240 = scalar_select %p239, %s18, 1
      %p241 = scmp.lt.s32.totalorder %s238, 3
      %s242 = scalar_select %p241, %s238, 3
      %s243 = smul.addr %s242, 4
      %s244 = smul.addr %s240, 16
      %s245 = sadd.s32 %s243, %s244
      %s246 = smul.addr %s245, 4
      %s247 = scalar_lea.vmem %s2, %s246
      %s248 = sadd.s32 %s19, 1
      %s249 = smul.u32 2, %s248
      %s250 = smul.u32 2, %s19
      %p251 = scmp.lt.s32.totalorder %s18, 1
      %s252 = scalar_select %p251, %s18, 1
      %p253 = scmp.lt.s32.totalorder %s250, 1
      %s254 = scalar_select %p253, %s250, 1
      %s255 = smul.addr %s254, 8
      %s256 = smul.addr %s252, 16
      %s257 = sadd.s32 %s255, %s256
      %s258 = smul.addr %s257, 4
      %s259 = scalar_lea.vmem %s3, %s258
      %s260 = smul.u32 2, %s19
      %v261 = vld [vmem:[%s0] sm:$0xf]
      %v262 = vld [vmem:[%s235] sm:$0xff]
      %v263 = vld [vmem:[%s235 + $0x8] sm:$0xff]
      %v264 = vld [vmem:[%s235 + $0x10] sm:$0xff]
      %v265 = vld [vmem:[%s235 + $0x18] sm:$0xff]
      %v266 = vld [vmem:[%s247] sm:$0xff]
      %v267 = vld [vmem:[%s247 + $0x8] sm:$0xff]
      %v268 = vld [vmem:[%s247 + $0x10] sm:$0xff]
      %v269 = vld [vmem:[%s247 + $0x18] sm:$0xff]
      %v272 = vcombine.high %v262, %v262
      %v273 = vcombine.high %v264, %v264
      %vm276 = vcmask 1043456
      %v277 = vsel %vm276, %v262, 0.0
      %v278 = vsel %vm276, %v272, 0.0
      %v279 = vadd.f32 %v277, %v278
      %280 = vadd.xlane.f32.xlu0 %v279
      %v281 = vpop.xlane.xlu0 %280
      %v282 = vsel %vm276, %v264, 0.0
      %v283 = vsel %vm276, %v273, 0.0
      %v284 = vadd.f32 %v282, %v283
      %285 = vadd.xlane.f32.xlu0 %v284
      %v286 = vpop.xlane.xlu0 %285
      %v287 = vmul.f32 %v281, 0.00390625
      %v288 = vmul.f32 %v286, 0.00390625
      %v289 = vmul.f32 %v261, %v287
      %v290 = vmul.f32 %v261, %v288
      %292 = vrot.lane.b32.xlu0 %v261, 127
      %v293 = vpop.permute.xlu0 %292
      %v295 = vadd.f32 %v289, %v293
      %v296 = vadd.f32 %v290, %v293
      %v297 = vxor.u32 %v295, 2147483648
      %v298 = vxor.u32 %v296, 2147483648
      %v299 = vmul.f32 %v297, 1.442695
      %v300 = vpow.pop %v299
      %v301 = vmul.f32 %v298, 1.442695
      %v302 = vpow.pop %v301
      %v303 = vadd.f32 %v300, 1.0
      %v304 = vadd.f32 %v302, 1.0
      %v305 = vrcp.pop %v303
      %v306 = vmul.f32 1.0, %v305
      %v307 = vrcp.pop %v304
      %v308 = vmul.f32 1.0, %v307
      %310 = vset.pattern.permute.xlu0 0
      %311 = vperm.xlu0 %310, %v306
      %v312 = vpop.permute.xlu0 %311
      %314 = vset.pattern.permute.xlu0 0
      %315 = vperm.xlu0 %314, %v308
      %v316 = vpop.permute.xlu0 %315
      %v318 = vunpack.c.l.s4 839922192
      %v319 = vunpack.c.0.s8 %v318
      %v320 = vlaneseq
      %v321 = vshrl.u32 %v320, 7
      %v322 = vsub.s32 %v319, %v321
      %v323 = vrot.slane %v312, %v322
      %v325 = vunpack.c.l.s4 839922192
      %v326 = vunpack.c.0.s8 %v325
      %v327 = vlaneseq
      %v328 = vshrl.u32 %v327, 7
      %v329 = vsub.s32 %v326, %v328
      %v330 = vrot.slane %v316, %v329
      %v333 = vmul.f32 %v262, %v323
      %v334 = vmul.f32 %v264, %v330
      %335 = vst [vmem:[%s259] sm:$0xff] %v333
      %336 = vst [vmem:[%s259 + $0x20] sm:$0xff] %v334
      %v339 = vcombine.high %v266, %v266
      %v340 = vcombine.high %v268, %v268
      %v343 = vsel %vm276, %v266, 0.0
      %v344 = vsel %vm276, %v339, 0.0
      %v345 = vadd.f32 %v343, %v344
      %346 = vadd.xlane.f32.xlu0 %v345
      %v347 = vpop.xlane.xlu0 %346
      %v348 = vsel %vm276, %v268, 0.0
      %v349 = vsel %vm276, %v340, 0.0
      %v350 = vadd.f32 %v348, %v349
      %351 = vadd.xlane.f32.xlu0 %v350
      %v352 = vpop.xlane.xlu0 %351
      %v353 = vmul.f32 %v347, 0.00390625
      %v354 = vmul.f32 %v352, 0.00390625
      %v355 = vmul.f32 %v261, %v353
      %v356 = vmul.f32 %v261, %v354
      %v357 = vadd.f32 %v355, %v293
      %v358 = vadd.f32 %v356, %v293
      %v359 = vxor.u32 %v357, 2147483648
      %v360 = vxor.u32 %v358, 2147483648
      %v361 = vmul.f32 %v359, 1.442695
      %v362 = vpow.pop %v361
      %v363 = vmul.f32 %v360, 1.442695
      %v364 = vpow.pop %v363
      %v365 = vadd.f32 %v362, 1.0
      %v366 = vadd.f32 %v364, 1.0
      %v367 = vrcp.pop %v365
      %v368 = vmul.f32 1.0, %v367
      %v369 = vrcp.pop %v366
      %v370 = vmul.f32 1.0, %v369
      %372 = vset.pattern.permute.xlu0 0
      %373 = vperm.xlu0 %372, %v368
      %v374 = vpop.permute.xlu0 %373
      %376 = vset.pattern.permute.xlu0 0
      %377 = vperm.xlu0 %376, %v370
      %v378 = vpop.permute.xlu0 %377
      %v380 = vunpack.c.l.s4 839922192
      %v381 = vunpack.c.0.s8 %v380
      %v382 = vlaneseq
      %v383 = vshrl.u32 %v382, 7
      %v384 = vsub.s32 %v381, %v383
      %v385 = vrot.slane %v374, %v384
      %v387 = vunpack.c.l.s4 839922192
      %v388 = vunpack.c.0.s8 %v387
      %v389 = vlaneseq
      %v390 = vshrl.u32 %v389, 7
      %v391 = vsub.s32 %v388, %v390
      %v392 = vrot.slane %v378, %v391
      %v395 = vmul.f32 %v266, %v385
      %v396 = vmul.f32 %v268, %v392
      %397 = vst [vmem:[%s259 + $0x8] sm:$0xff] %v395
      %398 = vst [vmem:[%s259 + $0x28] sm:$0xff] %v396
      %v401 = vcombine.high %v263, %v263
      %v402 = vcombine.high %v265, %v265
      %v405 = vsel %vm276, %v263, 0.0
      %v406 = vsel %vm276, %v401, 0.0
      %v407 = vadd.f32 %v405, %v406
      %408 = vadd.xlane.f32.xlu0 %v407
      %v409 = vpop.xlane.xlu0 %408
      %v410 = vsel %vm276, %v265, 0.0
      %v411 = vsel %vm276, %v402, 0.0
      %v412 = vadd.f32 %v410, %v411
      %413 = vadd.xlane.f32.xlu0 %v412
      %v414 = vpop.xlane.xlu0 %413
      %v415 = vmul.f32 %v263, %v263
      %v416 = vmul.f32 %v265, %v265
      %v419 = vcombine.high %v415, %v415
      %v420 = vcombine.high %v416, %v416
      %v423 = vsel %vm276, %v415, 0.0
      %v424 = vsel %vm276, %v419, 0.0
      %v425 = vadd.f32 %v423, %v424
      %426 = vadd.xlane.f32.xlu0 %v425
      %v427 = vpop.xlane.xlu0 %426
      %v428 = vsel %vm276, %v416, 0.0
      %v429 = vsel %vm276, %v420, 0.0
      %v430 = vadd.f32 %v428, %v429
      %431 = vadd.xlane.f32.xlu0 %v430
      %v432 = vpop.xlane.xlu0 %431
      %v433 = vmul.f32 %v409, 0.00390625
      %v434 = vmul.f32 %v414, 0.00390625
      %v435 = vmul.f32 %v427, 0.00390625
      %v436 = vmul.f32 %v432, 0.00390625
      %v437 = vmul.f32 %v433, %v433
      %v438 = vmul.f32 %v434, %v434
      %v439 = vsub.f32 %v435, %v437
      %v440 = vsub.f32 %v436, %v438
      %v441 = vmax.f32 %v439, 0.0
      %v442 = vmax.f32 %v440, 0.0
      %v443 = vadd.f32 %v441, 1e-05
      %v444 = vadd.f32 %v442, 1e-05
      %v445 = vrsqrt.pop %v443
      %v446 = vrsqrt.pop %v444
      %v447 = vmul.f32 %v261, %v445
      %v448 = vmul.f32 %v261, %v446
      %v449 = vmul.f32 %v447, %v433
      %v450 = vmul.f32 %v448, %v434
      %453 = vrot.lane.b32.xlu0 %v449, 1
      %v454 = vpop.permute.xlu0 %453
      %455 = vrot.lane.b32.xlu0 %v450, 1
      %v456 = vpop.permute.xlu0 %455
      %v459 = vsub.f32 %v261, %v454
      %v460 = vsub.f32 %v261, %v456
      %462 = vset.pattern.permute.xlu0 2
      %463 = vperm.xlu0 %462, %v447
      %v464 = vpop.permute.xlu0 %463
      %467 = vset.pattern.permute.xlu0 2
      %468 = vperm.xlu0 %467, %v448
      %v469 = vpop.permute.xlu0 %468
      %v471 = vmul.f32 %v464, %v263
      %v472 = vmul.f32 %v464, %v401
      %v473 = vmul.f32 %v469, %v265
      %v474 = vmul.f32 %v469, %v402
      %476 = vset.pattern.permute.xlu0 3
      %477 = vperm.xlu0 %476, %v459
      %v478 = vpop.permute.xlu0 %477
      %481 = vset.pattern.permute.xlu0 3
      %482 = vperm.xlu0 %481, %v460
      %v483 = vpop.permute.xlu0 %482
      %v485 = vadd.f32 %v471, %v478
      %v486 = vadd.f32 %v472, %v478
      %v487 = vadd.f32 %v473, %v483
      %v488 = vadd.f32 %v474, %v483
      %v489 = vxor.u32 %v485, 2147483648
      %v490 = vxor.u32 %v486, 2147483648
      %v491 = vxor.u32 %v487, 2147483648
      %v492 = vxor.u32 %v488, 2147483648
      %v493 = vmul.f32 %v489, 1.442695
      %v494 = vpow.pop %v493
      %v495 = vmul.f32 %v490, 1.442695
      %v496 = vpow.pop %v495
      %v497 = vmul.f32 %v491, 1.442695
      %v498 = vpow.pop %v497
      %v499 = vmul.f32 %v492, 1.442695
      %v500 = vpow.pop %v499
      %v501 = vadd.f32 %v494, 1.0
      %v502 = vadd.f32 %v496, 1.0
      %v503 = vadd.f32 %v498, 1.0
      %v504 = vadd.f32 %v500, 1.0
      %v505 = vrcp.pop %v501
      %v506 = vmul.f32 1.0, %v505
      %v507 = vrcp.pop %v502
      %v508 = vmul.f32 1.0, %v507
      %v509 = vrcp.pop %v503
      %v510 = vmul.f32 1.0, %v509
      %v511 = vrcp.pop %v504
      %v512 = vmul.f32 1.0, %v511
      %v517 = vcombine.low %v506, %v508
      %v518 = vcombine.low %v510, %v512
      %v521 = vmul.f32 %v263, %v517
      %v522 = vmul.f32 %v265, %v518
      %s523 = scalar_lea.vmem %s259, 16
      %524 = vst [vmem:[%s523] sm:$0xff] %v521
      %525 = vst [vmem:[%s523 + $0x20] sm:$0xff] %v522
      %v528 = vcombine.high %v267, %v267
      %v529 = vcombine.high %v269, %v269
      %v532 = vsel %vm276, %v267, 0.0
      %v533 = vsel %vm276, %v528, 0.0
      %v534 = vadd.f32 %v532, %v533
      %535 = vadd.xlane.f32.xlu0 %v534
      %v536 = vpop.xlane.xlu0 %535
      %v537 = vsel %vm276, %v269, 0.0
      %v538 = vsel %vm276, %v529, 0.0
      %v539 = vadd.f32 %v537, %v538
      %540 = vadd.xlane.f32.xlu0 %v539
      %v541 = vpop.xlane.xlu0 %540
      %v542 = vmul.f32 %v267, %v267
      %v543 = vmul.f32 %v269, %v269
      %v546 = vcombine.high %v542, %v542
      %v547 = vcombine.high %v543, %v543
      %v550 = vsel %vm276, %v542, 0.0
      %v551 = vsel %vm276, %v546, 0.0
      %v552 = vadd.f32 %v550, %v551
      %553 = vadd.xlane.f32.xlu0 %v552
      %v554 = vpop.xlane.xlu0 %553
      %v555 = vsel %vm276, %v543, 0.0
      %v556 = vsel %vm276, %v547, 0.0
      %v557 = vadd.f32 %v555, %v556
      %558 = vadd.xlane.f32.xlu0 %v557
      %v559 = vpop.xlane.xlu0 %558
      %v560 = vmul.f32 %v536, 0.00390625
      %v561 = vmul.f32 %v541, 0.00390625
      %v562 = vmul.f32 %v554, 0.00390625
      %v563 = vmul.f32 %v559, 0.00390625
      %v564 = vmul.f32 %v560, %v560
      %v565 = vmul.f32 %v561, %v561
      %v566 = vsub.f32 %v562, %v564
      %v567 = vsub.f32 %v563, %v565
      %v568 = vmax.f32 %v566, 0.0
      %v569 = vmax.f32 %v567, 0.0
      %v570 = vadd.f32 %v568, 1e-05
      %v571 = vadd.f32 %v569, 1e-05
      %v572 = vrsqrt.pop %v570
      %v573 = vrsqrt.pop %v571
      %v574 = vmul.f32 %v261, %v572
      %v575 = vmul.f32 %v261, %v573
      %v576 = vmul.f32 %v574, %v560
      %v577 = vmul.f32 %v575, %v561
      %580 = vrot.lane.b32.xlu0 %v576, 1
      %v581 = vpop.permute.xlu0 %580
      %582 = vrot.lane.b32.xlu0 %v577, 1
      %v583 = vpop.permute.xlu0 %582
      %v586 = vsub.f32 %v261, %v581
      %v587 = vsub.f32 %v261, %v583
      %589 = vset.pattern.permute.xlu0 2
      %590 = vperm.xlu0 %589, %v574
      %v591 = vpop.permute.xlu0 %590
      %594 = vset.pattern.permute.xlu0 2
      %595 = vperm.xlu0 %594, %v575
      %v596 = vpop.permute.xlu0 %595
      %v598 = vmul.f32 %v591, %v267
      %v599 = vmul.f32 %v591, %v528
      %v600 = vmul.f32 %v596, %v269
      %v601 = vmul.f32 %v596, %v529
      %603 = vset.pattern.permute.xlu0 3
      %604 = vperm.xlu0 %603, %v586
      %v605 = vpop.permute.xlu0 %604
      %608 = vset.pattern.permute.xlu0 3
      %609 = vperm.xlu0 %608, %v587
      %v610 = vpop.permute.xlu0 %609
      %v612 = vadd.f32 %v598, %v605
      %v613 = vadd.f32 %v599, %v605
      %v614 = vadd.f32 %v600, %v610
      %v615 = vadd.f32 %v601, %v610
      %v616 = vxor.u32 %v612, 2147483648
      %v617 = vxor.u32 %v613, 2147483648
      %v618 = vxor.u32 %v614, 2147483648
      %v619 = vxor.u32 %v615, 2147483648
      %v620 = vmul.f32 %v616, 1.442695
      %v621 = vpow.pop %v620
      %v622 = vmul.f32 %v617, 1.442695
      %v623 = vpow.pop %v622
      %v624 = vmul.f32 %v618, 1.442695
      %v625 = vpow.pop %v624
      %v626 = vmul.f32 %v619, 1.442695
      %v627 = vpow.pop %v626
      %v628 = vadd.f32 %v621, 1.0
      %v629 = vadd.f32 %v623, 1.0
      %v630 = vadd.f32 %v625, 1.0
      %v631 = vadd.f32 %v627, 1.0
      %v632 = vrcp.pop %v628
      %v633 = vmul.f32 1.0, %v632
      %v634 = vrcp.pop %v629
      %v635 = vmul.f32 1.0, %v634
      %v636 = vrcp.pop %v630
      %v637 = vmul.f32 1.0, %v636
      %v638 = vrcp.pop %v631
      %v639 = vmul.f32 1.0, %v638
      %v644 = vcombine.low %v633, %v635
      %v645 = vcombine.low %v637, %v639
      %v648 = vmul.f32 %v267, %v644
      %v649 = vmul.f32 %v269, %v645
      %650 = vst [vmem:[%s523 + $0x8] sm:$0xff] %v648
      %651 = vst [vmem:[%s523 + $0x28] sm:$0xff] %v649
      %s652 = smul.u32 2, %s19
      %p653 = scmp.lt.s32.totalorder %s18, 1
      %s654 = scalar_select %p653, %s18, 1
      %p655 = scmp.lt.s32.totalorder %s652, 1
      %s656 = scalar_select %p655, %s652, 1
      %s657 = smul.addr %s656, 8
      %s658 = smul.addr %s654, 16
      %s659 = sadd.s32 %s657, %s658
      %s660 = smul.addr %s659, 4
      %s661 = scalar_lea.vmem %s3, %s660
      // Predicated region
      $region33: #{_lambda_.1} parent=31 // pred_check
        %p662 = pneg %p125
      $region34: #{_lambda_.1} parent=31 // pred_check_branch
        %664 = sbr.rel (%p662) target = $region36
      $region35: #{_lambda_.1} parent=31 // pred_region
        %s665 = smul.u32 2, %s19
      $region36: #{_lambda_.1} parent=31 // pred_fallthru
        _
    $region32: #{_lambda_.1} parent=5 // pred_fallthru
      _
    %p666 = scmp.le.s32.totalorder 2, %s9
    // Predicated region
    $region37: #{_lambda_.1} parent=5 // pred_check
      %p667 = pneg %p666
    $region38: #{_lambda_.1} parent=5 // pred_check_branch
      %669 = sbr.rel (%p667) target = $region40
    $region39: #{_lambda_.1} parent=5 // pred_region
      %s670 = ssub.s32 %s9, 2
      // Predicated region
      $region41: #{_lambda_.1} parent=39 // pred_check
        %p671 = pneg %p131
      $region42: #{_lambda_.1} parent=39 // pred_check_branch
        %673 = sbr.rel (%p671) target = $region44
      $region43: #{_lambda_.1} parent=39 // pred_region
        %s674 = smul.u32 2, %s21
        %p675 = scmp.lt.s32.totalorder %s20, 1
        %s676 = scalar_select %p675, %s20, 1
        %p677 = scmp.lt.s32.totalorder %s674, 1
        %s678 = scalar_select %p677, %s674, 1
        %s679 = smul.addr %s678, 8
        %s680 = smul.addr %s676, 16
        %s681 = sadd.s32 %s679, %s680
        %s682 = smul.addr %s681, 4
        %s683 = scalar_lea.vmem %s3, %s682
      $region44: #{_lambda_.1} parent=39 // pred_fallthru
        _
    $region40: #{_lambda_.1} parent=5 // pred_fallthru
      _
  $region6: #{_lambda_.1} parent=0 // loop_footer
    %s13 = sadd.s32 1, %s9
  $region7: #{_lambda_.1} parent=0 // loop_footer_branch
    %8 = sbr.rel target = $region3
  $region8: #{_lambda_.1} parent=0 // loop_exit
    _

</llo_original>
